<compile_context>
chip_gen: v7x
topology: tpu7x:2x2x1
jax: 0.10.0
libtpu: 0.0.40
codegen_flags: <defaults>
</compile_context>

<pallas_src>
import jax
import jax.numpy as jnp
from jax.experimental import pallas as pl
from jax.experimental.pallas import tpu as pltpu

HIDDEN = 768     # BERT hidden size
FC1_OUT = 32
FC2_OUT = 1
MAX_TB = 4096    # max batch-tile rows (4096x768 bf16 = 6 MiB per buffer)


def _round_up(x, m):
    return ((x + m - 1) // m) * m


def _choose_tb(b16):
    """Batch-tile rows for a (b16, 768) activation (b16 is a multiple of 16).

    Large tiles amortize the ~0.35 us per-grid-step overhead; >= 2 tiles let
    both v7x TensorCores work. Prefers tile sizes that divide b16 exactly;
    otherwise the last tile is ragged (OOB rows are garbage reads whose
    outputs are discarded -- safe because every row is independent)."""
    if b16 <= 512:
        return b16                      # tiny batch: one tile
    if b16 <= 2 * MAX_TB and b16 % 32 == 0:
        return b16 // 2                 # two equal tiles (each a multiple of 16)
    return min(MAX_TB, b16)


def classifier_head_kernel(x_ref, w1_ref, bw_ref, b2_ref, o_ref):
    # fc1 on the MXU: bf16 inputs, f32 accumulation.
    h = jnp.dot(x_ref[...], w1_ref[...],
                preferred_element_type=jnp.float32)          # (TB, 32) f32

    bw = bw_ref[...]                                         # (2, 32) f32 resident
    b1 = bw[0:1, :]                                          # fc1 bias row
    w2 = bw[1:2, :]                                          # fc2 weight row

    h = jnp.maximum(h + b1, 0.0)                             # bias + ReLU (VPU)

    # fc2 (K=32, N=1): VPU multiply + lane reduction, not a second MXU matmul.
    y = jnp.sum(h * w2, axis=-1, keepdims=True) + b2_ref[0]  # (TB, 1) f32
    o_ref[...] = jax.nn.sigmoid(y).astype(o_ref.dtype)


def classifier_head(x_bf16, w1, b1w2, b2):
    """x_bf16: (B16, 768) bf16 CLS hidden states (B16 % 16 == 0) -> (B16, 1) f32."""
    b16 = x_bf16.shape[0]
    assert b16 % 16 == 0, "pad CLS ids to a multiple of 16 before the gather"
    tb = _choose_tb(b16)
    grid = pl.cdiv(b16, tb)             # last tile may be ragged (rows dropped)

    return pl.pallas_call(
        classifier_head_kernel,
        out_shape=jax.ShapeDtypeStruct((b16, FC2_OUT), jnp.float32),
        grid_spec=pltpu.PrefetchScalarGridSpec(
            num_scalar_prefetch=0,
            grid=(grid,),
            in_specs=[
                pl.BlockSpec((tb, HIDDEN), lambda i: (i, 0)),        # x tile (streamed)
                pl.BlockSpec((HIDDEN, FC1_OUT), lambda i: (0, 0)),   # w1 (resident)
                pl.BlockSpec((2, FC1_OUT), lambda i: (0, 0)),        # b1+w2 packed (resident)
                pl.BlockSpec(memory_space=pltpu.MemorySpace.SMEM),   # b2 scalar
            ],
            out_specs=pl.BlockSpec((tb, FC2_OUT), lambda i: (i, 0)),
        ),
        compiler_params=pltpu.CompilerParams(
            dimension_semantics=("parallel",),     # shard batch tiles over TCs on v7x
            vmem_limit_bytes=32 * 1024 * 1024,     # 2x6 MiB x-buffers + lane-padded out
        ),
    )(x_bf16, w1, b1w2, b2)


def custom_classifier1_forward(params, input_ids, attention_mask):
    # TODO(synk): the pretrained BERT encoder has no in-script Pallas
    # equivalent; a deterministic bf16 token-embedding lookup stands in for
    # bert(input_ids, attention_mask)[0][:, 0].  attention_mask is only
    # consumed by the real encoder, so the stand-in ignores it.
    del attention_mask
    B = input_ids.shape[0]
    b16 = _round_up(B, 16)
    cls_ids = input_ids[:, 0]
    if b16 != B:
        # Pad only the (B,) int32 ids (cheap) -- never the (B, 768) activation.
        cls_ids = jnp.pad(cls_ids, (0, b16 - B))
    cls_emb = params["embed_table"][cls_ids]        # (b16, 768) bf16, no f32 round-trip
    out = classifier_head(cls_emb, params["w1"], params["b1w2"], params["b2"])
    return out[:B]


def init_params(key, vocab_size=100):
    k_emb, k_w1, k_b1, k_w2, k_b2 = jax.random.split(key, 5)
    bound1 = 1.0 / jnp.sqrt(HIDDEN)
    bound2 = 1.0 / jnp.sqrt(FC1_OUT)
    b1 = jax.random.uniform(k_b1, (1, FC1_OUT), jnp.float32, -bound1, bound1)
    w2_row = jax.random.uniform(k_w2, (1, FC1_OUT), jnp.float32, -bound2, bound2)
    return {
        # bf16 table: the CLS gather directly yields the bf16 MXU operand.
        "embed_table": (jax.random.normal(k_emb, (vocab_size, HIDDEN),
                                          jnp.float32) * 0.02).astype(jnp.bfloat16),
        # fc1 weight stored transposed vs torch.nn.Linear ((in, out)), bf16.
        "w1": jax.random.uniform(k_w1, (HIDDEN, FC1_OUT), jnp.float32,
                                 -bound1, bound1).astype(jnp.bfloat16),
        # fc1 bias (row 0) and fc2 weight row (row 1) packed into one resident tile.
        "b1w2": jnp.concatenate([b1, w2_row], axis=0),       # (2, 32) f32
        "b2": jax.random.uniform(k_b2, (FC2_OUT,), jnp.float32, -bound2, bound2),
    }


def _reference(params, input_ids):
    """Mirrors the kernel's dtype choices (bf16 matmul inputs, f32 accum)."""
    cls_emb = params["embed_table"][input_ids[:, 0]]
    h = jnp.dot(cls_emb, params["w1"], preferred_element_type=jnp.float32)
    h = jnp.maximum(h + params["b1w2"][0:1, :], 0.0)
    return jax.nn.sigmoid(
        jnp.sum(h * params["b1w2"][1:2, :], axis=-1, keepdims=True) + params["b2"])


if __name__ == "__main__":
    key = jax.random.PRNGKey(0)
    k_param, k_ids = jax.random.split(key)

    B, S = 2, 8
    VOCAB = 100
    params = init_params(k_param, vocab_size=VOCAB)
    input_ids = jax.random.randint(k_ids, (B, S), 0, VOCAB, dtype=jnp.int32)
    attention_mask = jnp.ones((B, S), dtype=jnp.int32)

    fwd = jax.jit(custom_classifier1_forward)
    out = jax.block_until_ready(fwd(params, input_ids, attention_mask))

    ref = _reference(params, input_ids)

    # Full-f32 semantic reference (loose: bf16 only on the matmul inputs).
    x32 = params["embed_table"][input_ids[:, 0]].astype(jnp.float32)
    h32 = jnp.maximum(x32 @ params["w1"].astype(jnp.float32)
                      + params["b1w2"][0:1, :], 0.0)
    ref32 = jax.nn.sigmoid(h32 @ params["b1w2"][1:2, :].T + params["b2"])

    assert out.shape == (B, FC2_OUT)
    assert jnp.allclose(out, ref, atol=1e-5, rtol=1e-5)
    assert jnp.allclose(out, ref32, atol=1e-2, rtol=1e-2)

    # Larger batch: exercises the pad-ids-only path (600 -> 608 rows) and the
    # two-tile grid (tb = 304) that feeds both TensorCores on v7x.
    B2 = 600
    input_ids2 = jax.random.randint(jax.random.PRNGKey(1), (B2, S), 0, VOCAB,
                                    dtype=jnp.int32)
    attention_mask2 = jnp.ones((B2, S), dtype=jnp.int32)
    out2 = jax.block_until_ready(fwd(params, input_ids2, attention_mask2))
    ref2 = _reference(params, input_ids2)
    assert out2.shape == (B2, FC2_OUT)
    assert jnp.allclose(out2, ref2, atol=1e-5, rtol=1e-5)

    print("KERNEL_OK")
</pallas_src>

<mosaic_0001>
module attributes {stable_mosaic.version = 11 : i64} {
  func.func @classifier_head_kernel(%arg0: i32, %arg1: memref<16x768xbf16, #tpu.memory_space<vmem>>, %arg2: memref<768x32xbf16, #tpu.memory_space<vmem>>, %arg3: memref<2x32xf32, #tpu.memory_space<vmem>>, %arg4: memref<1xf32, #tpu.memory_space<smem>>, %arg5: memref<16x1xf32, #tpu.memory_space<vmem>>) attributes {dimension_semantics = [#tpu.dimension_semantics<parallel>], iteration_bounds = array<i64: 1>, scalar_prefetch = 0 : i64, scratch_operands = 0 : i64, tpu.core_type = #tpu.core_type<tc>, window_params = [{transform_indices = @transform_0, window_bounds = array<i64: 16, 768>}, {pipeline_mode = #tpu.pipeline_mode<synchronous>, transform_indices = @transform_1, window_bounds = array<i64: 768, 32>}, {pipeline_mode = #tpu.pipeline_mode<synchronous>, transform_indices = @transform_2, window_bounds = array<i64: 2, 32>}, {transform_indices = @transform_3, window_bounds = array<i64: 1>}, {transform_indices = @transform_4, window_bounds = array<i64: 16, 1>}]} {
    %c0 = arith.constant 0 : index
    %c0_0 = arith.constant 0 : index
    %0 = vector.load %arg1[%c0, %c0_0] : memref<16x768xbf16, #tpu.memory_space<vmem>>, vector<16x768xbf16>
    %c0_1 = arith.constant 0 : index
    %c0_2 = arith.constant 0 : index
    %1 = vector.load %arg2[%c0_1, %c0_2] : memref<768x32xbf16, #tpu.memory_space<vmem>>, vector<768x32xbf16>
    %cst = arith.constant dense<0.000000e+00> : vector<16x32xf32>
    %2 = tpu.matmul %0, %1, %cst {dimension_numbers = #tpu.dot_dimension_numbers<[1], [0], [0], [1], [0, 0, 1, 1], [], []>} : vector<16x768xbf16>, vector<768x32xbf16>, vector<16x32xf32> -> vector<16x32xf32>
    %c0_3 = arith.constant 0 : index
    %c0_4 = arith.constant 0 : index
    %3 = vector.load %arg3[%c0_3, %c0_4] : memref<2x32xf32, #tpu.memory_space<vmem>>, vector<2x32xf32>
    %4 = vector.extract_strided_slice %3 {offsets = [0, 0], sizes = [1, 32], strides = [1, 1]} : vector<2x32xf32> to vector<1x32xf32>
    %5 = vector.extract_strided_slice %3 {offsets = [1, 0], sizes = [1, 32], strides = [1, 1]} : vector<2x32xf32> to vector<1x32xf32>
    %6 = vector.broadcast %4 : vector<1x32xf32> to vector<16x32xf32>
    %7 = arith.addf %2, %6 : vector<16x32xf32>
    %cst_5 = arith.constant 0.000000e+00 : f32
    %8 = vector.broadcast %cst_5 : f32 to vector<16x32xf32>
    %9 = arith.maximumf %7, %8 : vector<16x32xf32>
    %10 = vector.broadcast %5 : vector<1x32xf32> to vector<16x32xf32>
    %11 = arith.mulf %9, %10 : vector<16x32xf32>
    %cst_6 = arith.constant dense<0.000000e+00> : vector<16xf32>
    %12 = vector.multi_reduction <add>, %11, %cst_6 [1] : vector<16x32xf32> to vector<16xf32>
    %13 = vector.shape_cast %12 : vector<16xf32> to vector<16x1xf32>
    %c0_7 = arith.constant 0 : index
    %14 = memref.load %arg4[%c0_7] : memref<1xf32, #tpu.memory_space<smem>>
    %15 = vector.broadcast %14 : f32 to vector<16x1xf32>
    %16 = arith.addf %13, %15 : vector<16x1xf32>
    %17 = arith.negf %16 : vector<16x1xf32>
    %18 = math.exp %17 : vector<16x1xf32>
    %cst_8 = arith.constant 1.000000e+00 : f32
    %19 = vector.broadcast %cst_8 : f32 to vector<16x1xf32>
    %20 = arith.addf %19, %18 : vector<16x1xf32>
    %21 = arith.divf %19, %20 : vector<16x1xf32>
    %c0_9 = arith.constant 0 : index
    %c0_10 = arith.constant 0 : index
    %22 = vector.load %arg5[%c0_9, %c0_10] : memref<16x1xf32, #tpu.memory_space<vmem>>, vector<16x1xf32>
    tpu.vector_store %arg5[%c0_9, %c0_10], %21 {strides = array<i32>} : memref<16x1xf32, #tpu.memory_space<vmem>>, vector<16x1xf32>,
    return
  }
  func.func @transform_0(%arg0: i32) -> (i32, i32) {
    %c0_i32 = arith.constant 0 : i32
    %c0_i32_0 = arith.constant 0 : i32
    return %arg0, %c0_i32 : i32, i32
  }
  func.func @transform_1(%arg0: i32) -> (i32, i32) {
    %c0_i32 = arith.constant 0 : i32
    %c0_i32_0 = arith.constant 0 : i32
    %c0_i32_1 = arith.constant 0 : i32
    return %c0_i32, %c0_i32_0 : i32, i32
  }
  func.func @transform_2(%arg0: i32) -> (i32, i32) {
    %c0_i32 = arith.constant 0 : i32
    %c0_i32_0 = arith.constant 0 : i32
    %c0_i32_1 = arith.constant 0 : i32
    return %c0_i32, %c0_i32_0 : i32, i32
  }
  func.func @transform_3(%arg0: i32) -> i32 {
    %c0_i32 = arith.constant 0 : i32
    %c0_i32_0 = arith.constant 0 : i32
    return %c0_i32 : i32
  }
  func.func @transform_4(%arg0: i32) -> (i32, i32) {
    %c0_i32 = arith.constant 0 : i32
    %c0_i32_0 = arith.constant 0 : i32
    return %arg0, %c0_i32 : i32, i32
  }
}

</mosaic_0001>

<llo_original>
// kernel: custom_classifier1_forward.1
$region0: #{custom_classifier1_forward.1}
  #allocation0 [shape = 'u32[]', space=smem, size = 0x4, offset = 0x4, fixed_abs, tag = 'smem constant byte address 0x4 - core index']
  #allocation1 [shape = 'u32[144,128]{1,0:T(1,128)}', space=vmem, size = 0x12000, scoped, tag = 'internal scratch']
  #allocation2 [shape = 'f32[1]{0:T(128)S(6)}', space=smem, size = 0x200, scoped, tag = 'scoped memory for custom_classifier1_forward.1']
  %s0 = inlined_call_operand.vmem [shape: bf16[16,768], index: 0, kind: input, shape index: {}]
  %s1 = inlined_call_operand.vmem [shape: bf16[768,32], index: 1, kind: input, shape index: {}]
  %s2 = inlined_call_operand.vmem [shape: f32[2,32], index: 2, kind: input, shape index: {}]
  %s3 = inlined_call_operand.<no memory space> [shape: f32[1], index: 3, kind: input, shape index: {}]
  %s4 = inlined_call_operand.vmem [shape: f32[16,1], index: 4, kind: output, shape index: {}]
  %s5 = sld [smem:[#allocation0]]
  $region26: #{custom_classifier1_forward.1} parent=0
    _
  %s7 = ssub.s32 1, %s5
  %s8 = scalar_select 0, %s7, %s5
  %9 = sst [smem:[#allocation2]] %s3
  // Predicated region
  $region2: #{custom_classifier1_forward.1} parent=0 // pred_check
    _
  $region3: #{custom_classifier1_forward.1} parent=0 // pred_check_branch
    %11 = sbr.rel (0) target = $region5
  $region4: #{custom_classifier1_forward.1} parent=0 // pred_region
    _
  $region5: #{custom_classifier1_forward.1} parent=0 // pred_fallthru
    _
  // Predicated region
  $region6: #{custom_classifier1_forward.1} parent=0 // pred_check
    _
  $region7: #{custom_classifier1_forward.1} parent=0 // pred_check_branch
    %13 = sbr.rel (0) target = $region9
  $region8: #{custom_classifier1_forward.1} parent=0 // pred_region
    _
  $region9: #{custom_classifier1_forward.1} parent=0 // pred_fallthru
    _
  // Predicated region
  $region10: #{custom_classifier1_forward.1} parent=0 // pred_check
    _
  $region11: #{custom_classifier1_forward.1} parent=0 // pred_check_branch
    %15 = sbr.rel (0) target = $region13
  $region12: #{custom_classifier1_forward.1} parent=0 // pred_region
    _
  $region13: #{custom_classifier1_forward.1} parent=0 // pred_fallthru
    _
  // Predicated region
  $region14: #{custom_classifier1_forward.1} parent=0 // pred_check
    _
  $region15: #{custom_classifier1_forward.1} parent=0 // pred_check_branch
    %17 = sbr.rel (0) target = $region17
  $region16: #{custom_classifier1_forward.1} parent=0 // pred_region
    _
  $region17: #{custom_classifier1_forward.1} parent=0 // pred_fallthru
    _
  %v19 = vld [vmem:[%s0] sm:$0xff]
  %v20 = vld [vmem:[%s0 + $0x8] sm:$0xff]
  %v21 = vld [vmem:[%s0 + $0x10] sm:$0xff]
  %v22 = vld [vmem:[%s0 + $0x18] sm:$0xff]
  %v23 = vld [vmem:[%s0 + $0x20] sm:$0xff]
  %v24 = vld [vmem:[%s0 + $0x28] sm:$0xff]
  %v25 = vld [vmem:[%s1] sm:$0xf]
  %v26 = vld [vmem:[%s1 + $0x4] sm:$0xf]
  %v27 = vld [vmem:[%s1 + $0x8] sm:$0xf]
  %v28 = vld [vmem:[%s1 + $0xc] sm:$0xf]
  %v29 = vld [vmem:[%s1 + $0x10] sm:$0xf]
  %v30 = vld [vmem:[%s1 + $0x14] sm:$0xf]
  %v31 = vld [vmem:[%s1 + $0x18] sm:$0xf]
  %v32 = vld [vmem:[%s1 + $0x1c] sm:$0xf]
  %v33 = vld [vmem:[%s1 + $0x20] sm:$0xf]
  %v34 = vld [vmem:[%s1 + $0x24] sm:$0xf]
  %v35 = vld [vmem:[%s1 + $0x28] sm:$0xf]
  %v36 = vld [vmem:[%s1 + $0x2c] sm:$0xf]
  %v37 = vld [vmem:[%s1 + $0x30] sm:$0xf]
  %v38 = vld [vmem:[%s1 + $0x34] sm:$0xf]
  %v39 = vld [vmem:[%s1 + $0x38] sm:$0xf]
  %v40 = vld [vmem:[%s1 + $0x3c] sm:$0xf]
  %v41 = vld [vmem:[%s1 + $0x40] sm:$0xf]
  %v42 = vld [vmem:[%s1 + $0x44] sm:$0xf]
  %v43 = vld [vmem:[%s1 + $0x48] sm:$0xf]
  %v44 = vld [vmem:[%s1 + $0x4c] sm:$0xf]
  %v45 = vld [vmem:[%s1 + $0x50] sm:$0xf]
  %v46 = vld [vmem:[%s1 + $0x54] sm:$0xf]
  %v47 = vld [vmem:[%s1 + $0x58] sm:$0xf]
  %v48 = vld [vmem:[%s1 + $0x5c] sm:$0xf]
  %v49 = vld [vmem:[%s1 + $0x60] sm:$0xf]
  %v50 = vld [vmem:[%s1 + $0x64] sm:$0xf]
  %v51 = vld [vmem:[%s1 + $0x68] sm:$0xf]
  %v52 = vld [vmem:[%s1 + $0x6c] sm:$0xf]
  %v53 = vld [vmem:[%s1 + $0x70] sm:$0xf]
  %v54 = vld [vmem:[%s1 + $0x74] sm:$0xf]
  %v55 = vld [vmem:[%s1 + $0x78] sm:$0xf]
  %v56 = vld [vmem:[%s1 + $0x7c] sm:$0xf]
  %v57 = vld [vmem:[%s1 + $0x80] sm:$0xf]
  %v58 = vld [vmem:[%s1 + $0x84] sm:$0xf]
  %v59 = vld [vmem:[%s1 + $0x88] sm:$0xf]
  %v60 = vld [vmem:[%s1 + $0x8c] sm:$0xf]
  %v61 = vld [vmem:[%s1 + $0x90] sm:$0xf]
  %v62 = vld [vmem:[%s1 + $0x94] sm:$0xf]
  %v63 = vld [vmem:[%s1 + $0x98] sm:$0xf]
  %v64 = vld [vmem:[%s1 + $0x9c] sm:$0xf]
  %v65 = vld [vmem:[%s1 + $0xa0] sm:$0xf]
  %v66 = vld [vmem:[%s1 + $0xa4] sm:$0xf]
  %v67 = vld [vmem:[%s1 + $0xa8] sm:$0xf]
  %v68 = vld [vmem:[%s1 + $0xac] sm:$0xf]
  %v69 = vld [vmem:[%s1 + $0xb0] sm:$0xf]
  %v70 = vld [vmem:[%s1 + $0xb4] sm:$0xf]
  %v71 = vld [vmem:[%s1 + $0xb8] sm:$0xf]
  %v72 = vld [vmem:[%s1 + $0xbc] sm:$0xf]
  %v73 = vld [vmem:[%s1 + $0xc0] sm:$0xf]
  %v74 = vld [vmem:[%s1 + $0xc4] sm:$0xf]
  %v75 = vld [vmem:[%s1 + $0xc8] sm:$0xf]
  %v76 = vld [vmem:[%s1 + $0xcc] sm:$0xf]
  %v77 = vld [vmem:[%s1 + $0xd0] sm:$0xf]
  %v78 = vld [vmem:[%s1 + $0xd4] sm:$0xf]
  %v79 = vld [vmem:[%s1 + $0xd8] sm:$0xf]
  %v80 = vld [vmem:[%s1 + $0xdc] sm:$0xf]
  %v81 = vld [vmem:[%s1 + $0xe0] sm:$0xf]
  %v82 = vld [vmem:[%s1 + $0xe4] sm:$0xf]
  %v83 = vld [vmem:[%s1 + $0xe8] sm:$0xf]
  %v84 = vld [vmem:[%s1 + $0xec] sm:$0xf]
  %v85 = vld [vmem:[%s1 + $0xf0] sm:$0xf]
  %v86 = vld [vmem:[%s1 + $0xf4] sm:$0xf]
  %v87 = vld [vmem:[%s1 + $0xf8] sm:$0xf]
  %v88 = vld [vmem:[%s1 + $0xfc] sm:$0xf]
  %v89 = vld [vmem:[%s1 + $0x100] sm:$0xf]
  %v90 = vld [vmem:[%s1 + $0x104] sm:$0xf]
  %v91 = vld [vmem:[%s1 + $0x108] sm:$0xf]
  %v92 = vld [vmem:[%s1 + $0x10c] sm:$0xf]
  %v93 = vld [vmem:[%s1 + $0x110] sm:$0xf]
  %v94 = vld [vmem:[%s1 + $0x114] sm:$0xf]
  %v95 = vld [vmem:[%s1 + $0x118] sm:$0xf]
  %v96 = vld [vmem:[%s1 + $0x11c] sm:$0xf]
  %v97 = vld [vmem:[%s1 + $0x120] sm:$0xf]
  %v98 = vld [vmem:[%s1 + $0x124] sm:$0xf]
  %v99 = vld [vmem:[%s1 + $0x128] sm:$0xf]
  %v100 = vld [vmem:[%s1 + $0x12c] sm:$0xf]
  %v101 = vld [vmem:[%s1 + $0x130] sm:$0xf]
  %v102 = vld [vmem:[%s1 + $0x134] sm:$0xf]
  %v103 = vld [vmem:[%s1 + $0x138] sm:$0xf]
  %v104 = vld [vmem:[%s1 + $0x13c] sm:$0xf]
  %v105 = vld [vmem:[%s1 + $0x140] sm:$0xf]
  %v106 = vld [vmem:[%s1 + $0x144] sm:$0xf]
  %v107 = vld [vmem:[%s1 + $0x148] sm:$0xf]
  %v108 = vld [vmem:[%s1 + $0x14c] sm:$0xf]
  %v109 = vld [vmem:[%s1 + $0x150] sm:$0xf]
  %v110 = vld [vmem:[%s1 + $0x154] sm:$0xf]
  %v111 = vld [vmem:[%s1 + $0x158] sm:$0xf]
  %v112 = vld [vmem:[%s1 + $0x15c] sm:$0xf]
  %v113 = vld [vmem:[%s1 + $0x160] sm:$0xf]
  %v114 = vld [vmem:[%s1 + $0x164] sm:$0xf]
  %v115 = vld [vmem:[%s1 + $0x168] sm:$0xf]
  %v116 = vld [vmem:[%s1 + $0x16c] sm:$0xf]
  %v117 = vld [vmem:[%s1 + $0x170] sm:$0xf]
  %v118 = vld [vmem:[%s1 + $0x174] sm:$0xf]
  %v119 = vld [vmem:[%s1 + $0x178] sm:$0xf]
  %v120 = vld [vmem:[%s1 + $0x17c] sm:$0xf]
  %v121 = vld [vmem:[%s2] sm:$0x3]
  %v122 = vlaneseq
  %v123 = vshrl.u32 %v122, 7
  %v124 = vsub.s32 0, %v123
  %v125 = vrot.slane %v121, %v124
  %v132 = vunpack.c.l.b16 %v19
  %v133 = vunpack.c.h.b16 %v19
  %v134 = vunpack.c.l.b16 %v20
  %v135 = vunpack.c.h.b16 %v20
  %v136 = vunpack.c.l.b16 %v21
  %v137 = vunpack.c.h.b16 %v21
  %v138 = vunpack.c.l.b16 %v22
  %v139 = vunpack.c.h.b16 %v22
  %v140 = vunpack.c.l.b16 %v23
  %v141 = vunpack.c.h.b16 %v23
  %v142 = vunpack.c.l.b16 %v24
  %v143 = vunpack.c.h.b16 %v24
  %v144 = vpack.c.b16 %v138, %v132
  %v145 = vpack.c.b16 %v139, %v133
  %v146 = vpack.c.b16 %v140, %v134
  %v147 = vpack.c.b16 %v141, %v135
  %v148 = vpack.c.b16 %v142, %v136
  %v149 = vpack.c.b16 %v143, %v137
  %v252 = vunpack.c.l.b16 %v25
  %v253 = vunpack.c.l.b16 %v26
  %v254 = vunpack.c.l.b16 %v27
  %v255 = vunpack.c.l.b16 %v28
  %v256 = vunpack.c.l.b16 %v29
  %v257 = vunpack.c.l.b16 %v30
  %v258 = vunpack.c.l.b16 %v31
  %v259 = vunpack.c.l.b16 %v32
  %v260 = vunpack.c.l.b16 %v33
  %v261 = vunpack.c.l.b16 %v34
  %v262 = vunpack.c.l.b16 %v35
  %v263 = vunpack.c.l.b16 %v36
  %v264 = vunpack.c.l.b16 %v37
  %v265 = vunpack.c.l.b16 %v38
  %v266 = vunpack.c.l.b16 %v39
  %v267 = vunpack.c.l.b16 %v40
  %v268 = vunpack.c.l.b16 %v41
  %v269 = vunpack.c.l.b16 %v42
  %v270 = vunpack.c.l.b16 %v43
  %v271 = vunpack.c.l.b16 %v44
  %v272 = vunpack.c.l.b16 %v45
  %v273 = vunpack.c.l.b16 %v46
  %v274 = vunpack.c.l.b16 %v47
  %v275 = vunpack.c.l.b16 %v48
  %v276 = vunpack.c.l.b16 %v49
  %v277 = vunpack.c.l.b16 %v50
  %v278 = vunpack.c.l.b16 %v51
  %v279 = vunpack.c.l.b16 %v52
  %v280 = vunpack.c.l.b16 %v53
  %v281 = vunpack.c.l.b16 %v54
  %v282 = vunpack.c.l.b16 %v55
  %v283 = vunpack.c.l.b16 %v56
  %v284 = vunpack.c.l.b16 %v57
  %v285 = vunpack.c.l.b16 %v58
  %v286 = vunpack.c.l.b16 %v59
  %v287 = vunpack.c.l.b16 %v60
  %v288 = vunpack.c.l.b16 %v61
  %v289 = vunpack.c.l.b16 %v62
  %v290 = vunpack.c.l.b16 %v63
  %v291 = vunpack.c.l.b16 %v64
  %v292 = vunpack.c.l.b16 %v65
  %v293 = vunpack.c.l.b16 %v66
  %v294 = vunpack.c.l.b16 %v67
  %v295 = vunpack.c.l.b16 %v68
  %v296 = vunpack.c.l.b16 %v69
  %v297 = vunpack.c.l.b16 %v70
  %v298 = vunpack.c.l.b16 %v71
  %v299 = vunpack.c.l.b16 %v72
  %v300 = vunpack.c.l.b16 %v73
  %v301 = vunpack.c.l.b16 %v74
  %v302 = vunpack.c.l.b16 %v75
  %v303 = vunpack.c.l.b16 %v76
  %v304 = vunpack.c.l.b16 %v77
  %v305 = vunpack.c.l.b16 %v78
  %v306 = vunpack.c.l.b16 %v79
  %v307 = vunpack.c.l.b16 %v80
  %v308 = vunpack.c.l.b16 %v81
  %v309 = vunpack.c.l.b16 %v82
  %v310 = vunpack.c.l.b16 %v83
  %v311 = vunpack.c.l.b16 %v84
  %v312 = vunpack.c.l.b16 %v85
  %v313 = vunpack.c.l.b16 %v86
  %v314 = vunpack.c.l.b16 %v87
  %v315 = vunpack.c.l.b16 %v88
  %v316 = vunpack.c.l.b16 %v89
  %v317 = vunpack.c.l.b16 %v90
  %v318 = vunpack.c.l.b16 %v91
  %v319 = vunpack.c.l.b16 %v92
  %v320 = vunpack.c.l.b16 %v93
  %v321 = vunpack.c.l.b16 %v94
  %v322 = vunpack.c.l.b16 %v95
  %v323 = vunpack.c.l.b16 %v96
  %v324 = vunpack.c.l.b16 %v97
  %v325 = vunpack.c.l.b16 %v98
  %v326 = vunpack.c.l.b16 %v99
  %v327 = vunpack.c.l.b16 %v100
  %v328 = vunpack.c.l.b16 %v101
  %v329 = vunpack.c.l.b16 %v102
  %v330 = vunpack.c.l.b16 %v103
  %v331 = vunpack.c.l.b16 %v104
  %v332 = vunpack.c.l.b16 %v105
  %v333 = vunpack.c.l.b16 %v106
  %v334 = vunpack.c.l.b16 %v107
  %v335 = vunpack.c.l.b16 %v108
  %v336 = vunpack.c.l.b16 %v109
  %v337 = vunpack.c.l.b16 %v110
  %v338 = vunpack.c.l.b16 %v111
  %v339 = vunpack.c.l.b16 %v112
  %v340 = vunpack.c.l.b16 %v113
  %v341 = vunpack.c.l.b16 %v114
  %v342 = vunpack.c.l.b16 %v115
  %v343 = vunpack.c.l.b16 %v116
  %v344 = vunpack.c.l.b16 %v117
  %v345 = vunpack.c.l.b16 %v118
  %v346 = vunpack.c.l.b16 %v119
  %v347 = vunpack.c.l.b16 %v120
  %v348 = vpack.c.b16 %v253, %v252
  %v349 = vpack.c.b16 %v255, %v254
  %v350 = vpack.c.b16 %v257, %v256
  %v351 = vpack.c.b16 %v259, %v258
  %v352 = vpack.c.b16 %v261, %v260
  %v353 = vpack.c.b16 %v263, %v262
  %v354 = vpack.c.b16 %v265, %v264
  %v355 = vpack.c.b16 %v267, %v266
  %v356 = vpack.c.b16 %v269, %v268
  %v357 = vpack.c.b16 %v271, %v270
  %v358 = vpack.c.b16 %v273, %v272
  %v359 = vpack.c.b16 %v275, %v274
  %v360 = vpack.c.b16 %v277, %v276
  %v361 = vpack.c.b16 %v279, %v278
  %v362 = vpack.c.b16 %v281, %v280
  %v363 = vpack.c.b16 %v283, %v282
  %v364 = vpack.c.b16 %v285, %v284
  %v365 = vpack.c.b16 %v287, %v286
  %v366 = vpack.c.b16 %v289, %v288
  %v367 = vpack.c.b16 %v291, %v290
  %v368 = vpack.c.b16 %v293, %v292
  %v369 = vpack.c.b16 %v295, %v294
  %v370 = vpack.c.b16 %v297, %v296
  %v371 = vpack.c.b16 %v299, %v298
  %v372 = vpack.c.b16 %v301, %v300
  %v373 = vpack.c.b16 %v303, %v302
  %v374 = vpack.c.b16 %v305, %v304
  %v375 = vpack.c.b16 %v307, %v306
  %v376 = vpack.c.b16 %v309, %v308
  %v377 = vpack.c.b16 %v311, %v310
  %v378 = vpack.c.b16 %v313, %v312
  %v379 = vpack.c.b16 %v315, %v314
  %v380 = vpack.c.b16 %v317, %v316
  %v381 = vpack.c.b16 %v319, %v318
  %v382 = vpack.c.b16 %v321, %v320
  %v383 = vpack.c.b16 %v323, %v322
  %v384 = vpack.c.b16 %v325, %v324
  %v385 = vpack.c.b16 %v327, %v326
  %v386 = vpack.c.b16 %v329, %v328
  %v387 = vpack.c.b16 %v331, %v330
  %v388 = vpack.c.b16 %v333, %v332
  %v389 = vpack.c.b16 %v335, %v334
  %v390 = vpack.c.b16 %v337, %v336
  %v391 = vpack.c.b16 %v339, %v338
  %v392 = vpack.c.b16 %v341, %v340
  %v393 = vpack.c.b16 %v343, %v342
  %v394 = vpack.c.b16 %v345, %v344
  %v395 = vpack.c.b16 %v347, %v346
  %444 = vmatprep.subr.bf16.mxu0 0
  %445 = vmatpush1.bf16.msra.mxu0 %v348
  %446 = vmatprep.subr.bf16.mxu0 0
  %447 = vmatpush1.bf16.msra.mxu0 %v349
  %448 = vmatprep.subr.bf16.mxu0 0
  %449 = vmatpush1.bf16.msra.mxu0 %v350
  %450 = vmatprep.subr.bf16.mxu0 0
  %451 = vmatpush1.bf16.msra.mxu0 %v351
  %452 = vmatprep.subr.bf16.mxu0 0
  %453 = vmatpush1.bf16.msra.mxu0 %v352
  %454 = vmatprep.subr.bf16.mxu0 0
  %455 = vmatpush1.bf16.msra.mxu0 %v353
  %456 = vmatprep.subr.bf16.mxu0 0
  %457 = vmatpush1.bf16.msra.mxu0 %v354
  %458 = vmatprep.subr.bf16.mxu0 0
  %459 = vmatpush1.bf16.msra.mxu0 %v355
  %460 = vmatprep.subr.bf16.mxu0 0
  %461 = vmatpush1.bf16.msra.mxu0 %v356
  %462 = vmatprep.subr.bf16.mxu0 0
  %463 = vmatpush1.bf16.msra.mxu0 %v357
  %464 = vmatprep.subr.bf16.mxu0 0
  %465 = vmatpush1.bf16.msra.mxu0 %v358
  %466 = vmatprep.subr.bf16.mxu0 0
  %467 = vmatpush1.bf16.msra.mxu0 %v359
  %468 = vmatprep.subr.bf16.mxu0 0
  %469 = vmatpush1.bf16.msra.mxu0 %v360
  %470 = vmatprep.subr.bf16.mxu0 0
  %471 = vmatpush1.bf16.msra.mxu0 %v361
  %472 = vmatprep.subr.bf16.mxu0 0
  %473 = vmatpush1.bf16.msra.mxu0 %v362
  %474 = vmatprep.subr.bf16.mxu0 0
  %475 = vmatpush1.bf16.msra.mxu0 %v363
  %476 = vmatprep.mubr.bf16.mxu0 %v145
  %477 = vmatmul.mubr.bf16.gmra.mrb[0].mxu0 %v144
  %v478 = vpop.f32.mrb[0].mxu0
  %v479 = vadd.f32 %v125, %v478
  %v480 = vpop.f32.mrb[0].mxu0
  %v481 = vpop.f32.mrb[0].mxu0
  %v482 = vadd.f32 %v125, %v481
  %v483 = vpop.f32.mrb[0].mxu0
  %484 = vdwg.mxu0
  %485 = vmatprep.subr.bf16.mxu0 0
  %486 = vmatpush1.bf16.msra.mxu0 %v364
  %487 = vmatprep.subr.bf16.mxu0 0
  %488 = vmatpush1.bf16.msra.mxu0 %v365
  %489 = vmatprep.subr.bf16.mxu0 0
  %490 = vmatpush1.bf16.msra.mxu0 %v366
  %491 = vmatprep.subr.bf16.mxu0 0
  %492 = vmatpush1.bf16.msra.mxu0 %v367
  %493 = vmatprep.subr.bf16.mxu0 0
  %494 = vmatpush1.bf16.msra.mxu0 %v368
  %495 = vmatprep.subr.bf16.mxu0 0
  %496 = vmatpush1.bf16.msra.mxu0 %v369
  %497 = vmatprep.subr.bf16.mxu0 0
  %498 = vmatpush1.bf16.msra.mxu0 %v370
  %499 = vmatprep.subr.bf16.mxu0 0
  %500 = vmatpush1.bf16.msra.mxu0 %v371
  %501 = vmatprep.subr.bf16.mxu0 0
  %502 = vmatpush1.bf16.msra.mxu0 %v372
  %503 = vmatprep.subr.bf16.mxu0 0
  %504 = vmatpush1.bf16.msra.mxu0 %v373
  %505 = vmatprep.subr.bf16.mxu0 0
  %506 = vmatpush1.bf16.msra.mxu0 %v374
  %507 = vmatprep.subr.bf16.mxu0 0
  %508 = vmatpush1.bf16.msra.mxu0 %v375
  %509 = vmatprep.subr.bf16.mxu0 0
  %510 = vmatpush1.bf16.msra.mxu0 %v376
  %511 = vmatprep.subr.bf16.mxu0 0
  %512 = vmatpush1.bf16.msra.mxu0 %v377
  %513 = vmatprep.subr.bf16.mxu0 0
  %514 = vmatpush1.bf16.msra.mxu0 %v378
  %515 = vmatprep.subr.bf16.mxu0 0
  %516 = vmatpush1.bf16.msra.mxu0 %v379
  %517 = vmatprep.mubr.bf16.mxu0 %v147
  %518 = vmatmul.mubr.bf16.gmra.mrb[0].mxu0 %v146
  %v519 = vpop.f32.mrb[0].mxu0
  %v520 = vadd.f32 %v479, %v519
  %v521 = vpop.f32.mrb[0].mxu0
  %v522 = vpop.f32.mrb[0].mxu0
  %v523 = vadd.f32 %v482, %v522
  %v524 = vpop.f32.mrb[0].mxu0
  %525 = vdwg.mxu0
  %526 = vmatprep.subr.bf16.mxu0 0
  %527 = vmatpush1.bf16.msra.mxu0 %v380
  %528 = vmatprep.subr.bf16.mxu0 0
  %529 = vmatpush1.bf16.msra.mxu0 %v381
  %530 = vmatprep.subr.bf16.mxu0 0
  %531 = vmatpush1.bf16.msra.mxu0 %v382
  %532 = vmatprep.subr.bf16.mxu0 0
  %533 = vmatpush1.bf16.msra.mxu0 %v383
  %534 = vmatprep.subr.bf16.mxu0 0
  %535 = vmatpush1.bf16.msra.mxu0 %v384
  %536 = vmatprep.subr.bf16.mxu0 0
  %537 = vmatpush1.bf16.msra.mxu0 %v385
  %538 = vmatprep.subr.bf16.mxu0 0
  %539 = vmatpush1.bf16.msra.mxu0 %v386
  %540 = vmatprep.subr.bf16.mxu0 0
  %541 = vmatpush1.bf16.msra.mxu0 %v387
  %542 = vmatprep.subr.bf16.mxu0 0
  %543 = vmatpush1.bf16.msra.mxu0 %v388
  %544 = vmatprep.subr.bf16.mxu0 0
  %545 = vmatpush1.bf16.msra.mxu0 %v389
  %546 = vmatprep.subr.bf16.mxu0 0
  %547 = vmatpush1.bf16.msra.mxu0 %v390
  %548 = vmatprep.subr.bf16.mxu0 0
  %549 = vmatpush1.bf16.msra.mxu0 %v391
  %550 = vmatprep.subr.bf16.mxu0 0
  %551 = vmatpush1.bf16.msra.mxu0 %v392
  %552 = vmatprep.subr.bf16.mxu0 0
  %553 = vmatpush1.bf16.msra.mxu0 %v393
  %554 = vmatprep.subr.bf16.mxu0 0
  %555 = vmatpush1.bf16.msra.mxu0 %v394
  %556 = vmatprep.subr.bf16.mxu0 0
  %557 = vmatpush1.bf16.msra.mxu0 %v395
  %558 = vmatprep.mubr.bf16.mxu0 %v149
  %559 = vmatmul.mubr.bf16.gmra.mrb[0].mxu0 %v148
  %v560 = vpop.f32.mrb[0].mxu0
  %v561 = vadd.f32 %v520, %v560
  %v562 = vpop.f32.mrb[0].mxu0
  %v563 = vpop.f32.mrb[0].mxu0
  %v564 = vadd.f32 %v523, %v563
  %v565 = vpop.f32.mrb[0].mxu0
  %566 = vdwg.mxu0
  %v567 = vmax.f32 %v561, 0.0
  %v568 = vmax.f32 %v564, 0.0
  %v569 = vlaneseq
  %v570 = vshrl.u32 %v569, 7
  %v571 = vsub.s32 1, %v570
  %v572 = vrot.slane %v121, %v571
  %v573 = vmul.f32 %v567, %v572
  %v574 = vmul.f32 %v568, %v572
  %vm575 = vcmask 261120
  %v576 = vsel %vm575, %v573, 0.0
  %577 = vadd.xlane.f32.xlu0 %v576
  %v578 = vpop.xlane.xlu0 %577
  %v579 = vsel %vm575, %v574, 0.0
  %580 = vadd.xlane.f32.xlu0 %v579
  %v581 = vpop.xlane.xlu0 %580
  %s582 = sld [smem:[#allocation2]]
  %v583 = vstv %s582
  %v584 = vadd.f32 %v578, %v583
  %v585 = vadd.f32 %v581, %v583
  %v586 = vxor.u32 %v584, 2147483648
  %v587 = vxor.u32 %v585, 2147483648
  %v588 = vmul.f32 %v586, 1.442695
  %v589 = vpow.pop %v588
  %v590 = vmul.f32 %v587, 1.442695
  %v591 = vpow.pop %v590
  %v592 = vadd.f32 %v589, 1.0
  %v593 = vadd.f32 %v591, 1.0
  %v594 = vrcp.pop %v592
  %v595 = vmul.f32 1.0, %v594
  %v596 = vrcp.pop %v593
  %v597 = vmul.f32 1.0, %v596
  %vm598 = vcmask 7168
  %599 = vst.msk [vmem:[%s4] sm:$0xff] %vm598, %v595
  %600 = vst.msk [vmem:[%s4 + $0x8] sm:$0xff] %vm598, %v597
  // Predicated region
  $region18: #{custom_classifier1_forward.1} parent=0 // pred_check
    _
  $region19: #{custom_classifier1_forward.1} parent=0 // pred_check_branch
    %602 = sbr.rel (0) target = $region21
  $region20: #{custom_classifier1_forward.1} parent=0 // pred_region
    _
  $region21: #{custom_classifier1_forward.1} parent=0 // pred_fallthru
    _
  // Predicated region
  $region22: #{custom_classifier1_forward.1} parent=0 // pred_check
    _
  $region23: #{custom_classifier1_forward.1} parent=0 // pred_check_branch
    %604 = sbr.rel (0) target = $region25
  $region24: #{custom_classifier1_forward.1} parent=0 // pred_region
    _
  $region25: #{custom_classifier1_forward.1} parent=0 // pred_fallthru
    _

</llo_original>
